<compile_context>
chip_gen: v7x
topology: tpu7x:2x2x1
jax: 0.10.0
libtpu: 0.0.40
codegen_flags: <defaults>
</compile_context>

<pallas_src>
import jax
import jax.numpy as jnp
from jax import lax
from jax.experimental import pallas as pl
from jax.experimental.pallas import tpu as pltpu

# TODO(synk): pretrained 'allenai/longformer-base-4096' weights and its
# sliding-window global/local attention have no in-script equivalent; a
# deterministic synthetic encoder produces the per-layer hidden states.

NUM_LAYERS = 4      # >= 4 so "last 4 hidden states" excludes the embedding layer,
                    # matching the real 12-layer Longformer semantics.
HIDDEN = 32         # logical hidden size of the synthetic encoder
VOCAB = 100
VOCAB_PAD = ((VOCAB + 7) // 8) * 8   # sublane-aligned contraction dim (zeros)


def _round_up(x, m):
    return ((x + m - 1) // m) * m


# ---------------------------------------------------------------------------
# Fused Pallas kernel: gather + mask + all layers + incremental last-4 sum
# ---------------------------------------------------------------------------
def _token_embedding_kernel(ids_ref, mask_ref, emb_ref, w_ref, b_ref, o_ref):
    # ids_ref : [TM, 1]            int32 token ids for this row tile
    # mask_ref: [TM, 1]            f32 attention mask (0 for padded rows)
    # emb_ref : [VOCAB_PAD, H]     embedding table, VMEM-resident across tiles
    # w_ref   : [L, H, H]          all layer weights, VMEM-resident
    # b_ref   : [L, 1, H]          all layer biases
    # o_ref   : [TM, H]            sum of the last 4 hidden states
    tm = ids_ref.shape[0]

    # Fused embedding gather: one-hot(ids) @ emb on the MXU (no host-side
    # gather / pad, activation never leaves vregs/VMEM).
    # TODO(synk): for a realistic vocab (~50k) this becomes a per-row DMA
    # gather from an HBM-resident table instead of a one-hot matmul.
    ids = ids_ref[...]                                               # [TM, 1]
    hot = ids == lax.broadcasted_iota(jnp.int32, (tm, VOCAB_PAD), 1)
    x = jnp.dot(hot.astype(jnp.float32), emb_ref[...],
                preferred_element_type=jnp.float32)                  # [TM, H]
    x = x * mask_ref[...]          # mask (also zeroes any padded rows)

    # Static layer loop; the last-4 window is decided at trace time, so there
    # is no per-layer vselect and no zero-init accumulator add.
    acc = None
    for i in range(NUM_LAYERS):
        h = jnp.dot(x, w_ref[i], preferred_element_type=jnp.float32) + b_ref[i]
        # TODO(synk): HuggingFace Longformer uses the exact erf GELU; switch
        # if real checkpoint weights are ever loaded.
        # TODO(synk): on v6e/v7x cast x / w to bf16 for the dot (keep f32
        # accumulate) to halve DMA bytes and hit the native bf16 MXU path.
        x = jax.nn.gelu(h, approximate=True)
        if i >= NUM_LAYERS - 4:      # hidden_states[i+1] is in the last-4 window
            acc = x if acc is None else acc + x
    o_ref[...] = acc


def _fused_forward(ids_p, mask_p, emb_pad, w_all, b_all, tm):
    s_pad = ids_p.shape[0]
    grid = (s_pad // tm,)
    return pl.pallas_call(
        _token_embedding_kernel,
        out_shape=jax.ShapeDtypeStruct((s_pad, HIDDEN), jnp.float32),
        grid=grid,
        in_specs=[
            pl.BlockSpec((tm, 1), lambda i: (i, 0)),                        # ids
            pl.BlockSpec((tm, 1), lambda i: (i, 0)),                        # mask
            pl.BlockSpec((VOCAB_PAD, HIDDEN), lambda i: (0, 0)),            # emb (resident)
            pl.BlockSpec((NUM_LAYERS, HIDDEN, HIDDEN), lambda i: (0, 0, 0)),  # weights (resident)
            pl.BlockSpec((NUM_LAYERS, 1, HIDDEN), lambda i: (0, 0, 0)),     # biases (resident)
        ],
        out_specs=pl.BlockSpec((tm, HIDDEN), lambda i: (i, 0)),
        compiler_params=pltpu.CompilerParams(
            dimension_semantics=("parallel",),   # shard row tiles across TCs (v7x)
        ),
        # TODO(synk): at real Longformer sizes (H=768, 12 layers) stream the
        # weights with a layer grid axis (block (1,H,H), index_map (l,0,0))
        # and set vmem_limit_bytes explicitly (v7x has only 64 MiB VMEM).
    )(ids_p, mask_p, emb_pad, w_all, b_all)


# ---------------------------------------------------------------------------
# Parameters (deterministic, synthetic)
# ---------------------------------------------------------------------------
def init_params(key):
    keys = jax.random.split(key, 2 * NUM_LAYERS + 1)
    emb = 0.02 * jax.random.normal(keys[0], (VOCAB, HIDDEN), jnp.float32)
    ws = [
        jax.random.normal(keys[1 + i], (HIDDEN, HIDDEN), jnp.float32)
        / jnp.sqrt(jnp.float32(HIDDEN))
        for i in range(NUM_LAYERS)
    ]
    bs = [
        0.01 * jax.random.normal(keys[1 + NUM_LAYERS + i], (1, HIDDEN), jnp.float32)
        for i in range(NUM_LAYERS)
    ]
    # Kernel-side copies: NO 32->128 lane padding; only the vocab (contraction)
    # rows are padded to a sublane multiple with zeros.
    emb_pad = jnp.zeros((VOCAB_PAD, HIDDEN), jnp.float32).at[:VOCAB].set(emb)
    w_all = jnp.stack(ws, axis=0)          # [L, H, H]
    b_all = jnp.stack(bs, axis=0)          # [L, 1, H]
    return {"emb": emb, "ws": ws, "bs": bs,
            "emb_pad": emb_pad, "w_all": w_all, "b_all": b_all}


# ---------------------------------------------------------------------------
# Forward pass (mirrors Token_Embedding.forward)
# ---------------------------------------------------------------------------
def token_embedding_forward(params, input_ids, attention_mask):
    assert NUM_LAYERS >= 4, "last-4 semantics assume >= 4 encoder layers"
    B, S = input_ids.shape

    # Only batch element 0 reaches the output ([:, 0, :, :] select); rows are
    # independent in this synthetic encoder, so batches 1..B-1 are dead work.
    ids0 = input_ids[0].astype(jnp.int32)
    mask0 = attention_mask[0].astype(jnp.float32)

    # Row tiling: a few hundred rows per tile keeps the MXU M-dim fed and
    # gives v7x a parallel grid axis to shard across its two TensorCores.
    tm = min(256, _round_up(S, 8))
    s_pad = _round_up(S, tm)

    if s_pad == S:
        ids_p = ids0[:, None]
        mask_p = mask0[:, None]
    else:
        # Padded rows use id 0 with mask 0 -> zero embedding contribution;
        # they are sliced off below, never reduced over inside the kernel.
        ids_p = jnp.zeros((s_pad, 1), jnp.int32).at[:S, 0].set(ids0)
        mask_p = jnp.zeros((s_pad, 1), jnp.float32).at[:S, 0].set(mask0)

    out = _fused_forward(ids_p, mask_p, params["emb_pad"],
                         params["w_all"], params["b_all"], tm)
    return out if s_pad == S else out[:S]          # [S, HIDDEN]


if __name__ == "__main__":
    key = jax.random.PRNGKey(0)
    k_params, k_ids = jax.random.split(key)

    params = init_params(k_params)

    B, S = 2, 8
    input_ids = jax.random.randint(k_ids, (B, S), 0, VOCAB, dtype=jnp.int32)
    attention_mask = jnp.ones((B, S), dtype=jnp.int32)

    out = token_embedding_forward(params, input_ids, attention_mask)
    out = jax.block_until_ready(out)

    # Plain-JAX reference of the same synthetic forward, following the original
    # module structure exactly (full batch, stack, [:,0], sum of last 4).
    h0 = params["emb"][input_ids] * attention_mask[..., None].astype(jnp.float32)
    hs = [h0]
    x = h0.reshape(B * S, HIDDEN)
    for w, b in zip(params["ws"], params["bs"]):
        x = jax.nn.gelu(x @ w + b, approximate=True)
        hs.append(x.reshape(B, S, HIDDEN))
    ref = jnp.sum(jnp.stack(hs, axis=0)[-4:, 0, :, :], axis=0)

    assert out.shape == (S, HIDDEN)
    # Tolerance covers MXU f32 multi-pass vs. XLA gather/matmul rounding.
    assert jnp.allclose(out, ref, atol=1e-3, rtol=1e-2)

    print("KERNEL_OK")
</pallas_src>

<mosaic_0001>
module attributes {stable_mosaic.version = 11 : i64} {
  func.func @_token_embedding_kernel(%arg0: i32, %arg1: memref<8x1xi32, #tpu.memory_space<vmem>>, %arg2: memref<8x1xf32, #tpu.memory_space<vmem>>, %arg3: memref<104x32xf32, #tpu.memory_space<vmem>>, %arg4: memref<4x32x32xf32, #tpu.memory_space<vmem>>, %arg5: memref<4x1x32xf32, #tpu.memory_space<vmem>>, %arg6: memref<8x32xf32, #tpu.memory_space<vmem>>) attributes {dimension_semantics = [#tpu.dimension_semantics<parallel>], iteration_bounds = array<i64: 1>, scalar_prefetch = 0 : i64, scratch_operands = 0 : i64, tpu.core_type = #tpu.core_type<tc>, window_params = [{transform_indices = @transform_0, window_bounds = array<i64: 8, 1>}, {transform_indices = @transform_1, window_bounds = array<i64: 8, 1>}, {pipeline_mode = #tpu.pipeline_mode<synchronous>, transform_indices = @transform_2, window_bounds = array<i64: 104, 32>}, {pipeline_mode = #tpu.pipeline_mode<synchronous>, transform_indices = @transform_3, window_bounds = array<i64: 4, 32, 32>}, {pipeline_mode = #tpu.pipeline_mode<synchronous>, transform_indices = @transform_4, window_bounds = array<i64: 4, 1, 32>}, {transform_indices = @transform_5, window_bounds = array<i64: 8, 32>}]} {
    %c0 = arith.constant 0 : index
    %c0_0 = arith.constant 0 : index
    %0 = vector.load %arg1[%c0, %c0_0] : memref<8x1xi32, #tpu.memory_space<vmem>>, vector<8x1xi32>
    %1 = tpu.iota {dimensions = array<i32: 1>} : vector<8x104xi32>
    %2 = vector.broadcast %0 : vector<8x1xi32> to vector<8x104xi32>
    %3 = arith.cmpi eq, %2, %1 : vector<8x104xi32>
    %4 = arith.extui %3 : vector<8x104xi1> to vector<8x104xi32>
    %5 = arith.sitofp %4 : vector<8x104xi32> to vector<8x104xf32>
    %c0_1 = arith.constant 0 : index
    %c0_2 = arith.constant 0 : index
    %6 = vector.load %arg3[%c0_1, %c0_2] : memref<104x32xf32, #tpu.memory_space<vmem>>, vector<104x32xf32>
    %cst = arith.constant dense<0.000000e+00> : vector<8x32xf32>
    %7 = tpu.matmul %5, %6, %cst {dimension_numbers = #tpu.dot_dimension_numbers<[1], [0], [0], [1], [0, 0, 1, 1], [], []>} : vector<8x104xf32>, vector<104x32xf32>, vector<8x32xf32> -> vector<8x32xf32>
    %c0_3 = arith.constant 0 : index
    %c0_4 = arith.constant 0 : index
    %8 = vector.load %arg2[%c0_3, %c0_4] : memref<8x1xf32, #tpu.memory_space<vmem>>, vector<8x1xf32>
    %9 = vector.broadcast %8 : vector<8x1xf32> to vector<8x32xf32>
    %10 = arith.mulf %7, %9 : vector<8x32xf32>
    %c0_5 = arith.constant 0 : index
    %c0_6 = arith.constant 0 : index
    %c0_7 = arith.constant 0 : index
    %11 = vector.load %arg4[%c0_5, %c0_6, %c0_7] : memref<4x32x32xf32, #tpu.memory_space<vmem>>, vector<1x32x32xf32>
    %12 = vector.shape_cast %11 : vector<1x32x32xf32> to vector<32x32xf32>
    %cst_8 = arith.constant dense<0.000000e+00> : vector<8x32xf32>
    %13 = tpu.matmul %10, %12, %cst_8 {dimension_numbers = #tpu.dot_dimension_numbers<[1], [0], [0], [1], [0, 0, 1, 1], [], []>} : vector<8x32xf32>, vector<32x32xf32>, vector<8x32xf32> -> vector<8x32xf32>
    %c0_9 = arith.constant 0 : index
    %c0_10 = arith.constant 0 : index
    %c0_11 = arith.constant 0 : index
    %14 = vector.load %arg5[%c0_9, %c0_10, %c0_11] : memref<4x1x32xf32, #tpu.memory_space<vmem>>, vector<1x1x32xf32>
    %15 = vector.shape_cast %14 : vector<1x1x32xf32> to vector<1x32xf32>
    %16 = vector.broadcast %15 : vector<1x32xf32> to vector<8x32xf32>
    %17 = arith.addf %13, %16 : vector<8x32xf32>
    %18 = arith.mulf %17, %17 : vector<8x32xf32>
    %19 = arith.mulf %17, %18 : vector<8x32xf32>
    %cst_12 = arith.constant 4.471500e-02 : f32
    %20 = vector.broadcast %cst_12 : f32 to vector<8x32xf32>
    %21 = arith.mulf %20, %19 : vector<8x32xf32>
    %22 = arith.addf %17, %21 : vector<8x32xf32>
    %cst_13 = arith.constant 0.797884583 : f32
    %23 = vector.broadcast %cst_13 : f32 to vector<8x32xf32>
    %24 = arith.mulf %23, %22 : vector<8x32xf32>
    %25 = math.tanh %24 : vector<8x32xf32>
    %cst_14 = arith.constant 1.000000e+00 : f32
    %26 = vector.broadcast %cst_14 : f32 to vector<8x32xf32>
    %27 = arith.addf %26, %25 : vector<8x32xf32>
    %cst_15 = arith.constant 5.000000e-01 : f32
    %28 = vector.broadcast %cst_15 : f32 to vector<8x32xf32>
    %29 = arith.mulf %28, %27 : vector<8x32xf32>
    %30 = arith.mulf %17, %29 : vector<8x32xf32>
    %c1 = arith.constant 1 : index
    %c0_16 = arith.constant 0 : index
    %c0_17 = arith.constant 0 : index
    %31 = vector.load %arg4[%c1, %c0_16, %c0_17] : memref<4x32x32xf32, #tpu.memory_space<vmem>>, vector<1x32x32xf32>
    %32 = vector.shape_cast %31 : vector<1x32x32xf32> to vector<32x32xf32>
    %cst_18 = arith.constant dense<0.000000e+00> : vector<8x32xf32>
    %33 = tpu.matmul %30, %32, %cst_18 {dimension_numbers = #tpu.dot_dimension_numbers<[1], [0], [0], [1], [0, 0, 1, 1], [], []>} : vector<8x32xf32>, vector<32x32xf32>, vector<8x32xf32> -> vector<8x32xf32>
    %c1_19 = arith.constant 1 : index
    %c0_20 = arith.constant 0 : index
    %c0_21 = arith.constant 0 : index
    %34 = vector.load %arg5[%c1_19, %c0_20, %c0_21] : memref<4x1x32xf32, #tpu.memory_space<vmem>>, vector<1x1x32xf32>
    %35 = vector.shape_cast %34 : vector<1x1x32xf32> to vector<1x32xf32>
    %36 = vector.broadcast %35 : vector<1x32xf32> to vector<8x32xf32>
    %37 = arith.addf %33, %36 : vector<8x32xf32>
    %38 = arith.mulf %37, %37 : vector<8x32xf32>
    %39 = arith.mulf %37, %38 : vector<8x32xf32>
    %cst_22 = arith.constant 4.471500e-02 : f32
    %40 = vector.broadcast %cst_22 : f32 to vector<8x32xf32>
    %41 = arith.mulf %40, %39 : vector<8x32xf32>
    %42 = arith.addf %37, %41 : vector<8x32xf32>
    %cst_23 = arith.constant 0.797884583 : f32
    %43 = vector.broadcast %cst_23 : f32 to vector<8x32xf32>
    %44 = arith.mulf %43, %42 : vector<8x32xf32>
    %45 = math.tanh %44 : vector<8x32xf32>
    %cst_24 = arith.constant 1.000000e+00 : f32
    %46 = vector.broadcast %cst_24 : f32 to vector<8x32xf32>
    %47 = arith.addf %46, %45 : vector<8x32xf32>
    %cst_25 = arith.constant 5.000000e-01 : f32
    %48 = vector.broadcast %cst_25 : f32 to vector<8x32xf32>
    %49 = arith.mulf %48, %47 : vector<8x32xf32>
    %50 = arith.mulf %37, %49 : vector<8x32xf32>
    %51 = arith.addf %30, %50 : vector<8x32xf32>
    %c2 = arith.constant 2 : index
    %c0_26 = arith.constant 0 : index
    %c0_27 = arith.constant 0 : index
    %52 = vector.load %arg4[%c2, %c0_26, %c0_27] : memref<4x32x32xf32, #tpu.memory_space<vmem>>, vector<1x32x32xf32>
    %53 = vector.shape_cast %52 : vector<1x32x32xf32> to vector<32x32xf32>
    %cst_28 = arith.constant dense<0.000000e+00> : vector<8x32xf32>
    %54 = tpu.matmul %50, %53, %cst_28 {dimension_numbers = #tpu.dot_dimension_numbers<[1], [0], [0], [1], [0, 0, 1, 1], [], []>} : vector<8x32xf32>, vector<32x32xf32>, vector<8x32xf32> -> vector<8x32xf32>
    %c2_29 = arith.constant 2 : index
    %c0_30 = arith.constant 0 : index
    %c0_31 = arith.constant 0 : index
    %55 = vector.load %arg5[%c2_29, %c0_30, %c0_31] : memref<4x1x32xf32, #tpu.memory_space<vmem>>, vector<1x1x32xf32>
    %56 = vector.shape_cast %55 : vector<1x1x32xf32> to vector<1x32xf32>
    %57 = vector.broadcast %56 : vector<1x32xf32> to vector<8x32xf32>
    %58 = arith.addf %54, %57 : vector<8x32xf32>
    %59 = arith.mulf %58, %58 : vector<8x32xf32>
    %60 = arith.mulf %58, %59 : vector<8x32xf32>
    %cst_32 = arith.constant 4.471500e-02 : f32
    %61 = vector.broadcast %cst_32 : f32 to vector<8x32xf32>
    %62 = arith.mulf %61, %60 : vector<8x32xf32>
    %63 = arith.addf %58, %62 : vector<8x32xf32>
    %cst_33 = arith.constant 0.797884583 : f32
    %64 = vector.broadcast %cst_33 : f32 to vector<8x32xf32>
    %65 = arith.mulf %64, %63 : vector<8x32xf32>
    %66 = math.tanh %65 : vector<8x32xf32>
    %cst_34 = arith.constant 1.000000e+00 : f32
    %67 = vector.broadcast %cst_34 : f32 to vector<8x32xf32>
    %68 = arith.addf %67, %66 : vector<8x32xf32>
    %cst_35 = arith.constant 5.000000e-01 : f32
    %69 = vector.broadcast %cst_35 : f32 to vector<8x32xf32>
    %70 = arith.mulf %69, %68 : vector<8x32xf32>
    %71 = arith.mulf %58, %70 : vector<8x32xf32>
    %72 = arith.addf %51, %71 : vector<8x32xf32>
    %c3 = arith.constant 3 : index
    %c0_36 = arith.constant 0 : index
    %c0_37 = arith.constant 0 : index
    %73 = vector.load %arg4[%c3, %c0_36, %c0_37] : memref<4x32x32xf32, #tpu.memory_space<vmem>>, vector<1x32x32xf32>
    %74 = vector.shape_cast %73 : vector<1x32x32xf32> to vector<32x32xf32>
    %cst_38 = arith.constant dense<0.000000e+00> : vector<8x32xf32>
    %75 = tpu.matmul %71, %74, %cst_38 {dimension_numbers = #tpu.dot_dimension_numbers<[1], [0], [0], [1], [0, 0, 1, 1], [], []>} : vector<8x32xf32>, vector<32x32xf32>, vector<8x32xf32> -> vector<8x32xf32>
    %c3_39 = arith.constant 3 : index
    %c0_40 = arith.constant 0 : index
    %c0_41 = arith.constant 0 : index
    %76 = vector.load %arg5[%c3_39, %c0_40, %c0_41] : memref<4x1x32xf32, #tpu.memory_space<vmem>>, vector<1x1x32xf32>
    %77 = vector.shape_cast %76 : vector<1x1x32xf32> to vector<1x32xf32>
    %78 = vector.broadcast %77 : vector<1x32xf32> to vector<8x32xf32>
    %79 = arith.addf %75, %78 : vector<8x32xf32>
    %80 = arith.mulf %79, %79 : vector<8x32xf32>
    %81 = arith.mulf %79, %80 : vector<8x32xf32>
    %cst_42 = arith.constant 4.471500e-02 : f32
    %82 = vector.broadcast %cst_42 : f32 to vector<8x32xf32>
    %83 = arith.mulf %82, %81 : vector<8x32xf32>
    %84 = arith.addf %79, %83 : vector<8x32xf32>
    %cst_43 = arith.constant 0.797884583 : f32
    %85 = vector.broadcast %cst_43 : f32 to vector<8x32xf32>
    %86 = arith.mulf %85, %84 : vector<8x32xf32>
    %87 = math.tanh %86 : vector<8x32xf32>
    %cst_44 = arith.constant 1.000000e+00 : f32
    %88 = vector.broadcast %cst_44 : f32 to vector<8x32xf32>
    %89 = arith.addf %88, %87 : vector<8x32xf32>
    %cst_45 = arith.constant 5.000000e-01 : f32
    %90 = vector.broadcast %cst_45 : f32 to vector<8x32xf32>
    %91 = arith.mulf %90, %89 : vector<8x32xf32>
    %92 = arith.mulf %79, %91 : vector<8x32xf32>
    %93 = arith.addf %72, %92 : vector<8x32xf32>
    %c0_46 = arith.constant 0 : index
    %c0_47 = arith.constant 0 : index
    %94 = vector.load %arg6[%c0_46, %c0_47] : memref<8x32xf32, #tpu.memory_space<vmem>>, vector<8x32xf32>
    tpu.vector_store %arg6[%c0_46, %c0_47], %93 {strides = array<i32>} : memref<8x32xf32, #tpu.memory_space<vmem>>, vector<8x32xf32>,
    return
  }
  func.func @transform_0(%arg0: i32) -> (i32, i32) {
    %c0_i32 = arith.constant 0 : i32
    %c0_i32_0 = arith.constant 0 : i32
    return %arg0, %c0_i32 : i32, i32
  }
  func.func @transform_1(%arg0: i32) -> (i32, i32) {
    %c0_i32 = arith.constant 0 : i32
    %c0_i32_0 = arith.constant 0 : i32
    return %arg0, %c0_i32 : i32, i32
  }
  func.func @transform_2(%arg0: i32) -> (i32, i32) {
    %c0_i32 = arith.constant 0 : i32
    %c0_i32_0 = arith.constant 0 : i32
    %c0_i32_1 = arith.constant 0 : i32
    return %c0_i32, %c0_i32_0 : i32, i32
  }
  func.func @transform_3(%arg0: i32) -> (i32, i32, i32) {
    %c0_i32 = arith.constant 0 : i32
    %c0_i32_0 = arith.constant 0 : i32
    %c0_i32_1 = arith.constant 0 : i32
    %c0_i32_2 = arith.constant 0 : i32
    return %c0_i32, %c0_i32_0, %c0_i32_1 : i32, i32, i32
  }
  func.func @transform_4(%arg0: i32) -> (i32, i32, i32) {
    %c0_i32 = arith.constant 0 : i32
    %c0_i32_0 = arith.constant 0 : i32
    %c0_i32_1 = arith.constant 0 : i32
    %c0_i32_2 = arith.constant 0 : i32
    return %c0_i32, %c0_i32_0, %c0_i32_1 : i32, i32, i32
  }
  func.func @transform_5(%arg0: i32) -> (i32, i32) {
    %c0_i32 = arith.constant 0 : i32
    %c0_i32_0 = arith.constant 0 : i32
    return %arg0, %c0_i32 : i32, i32
  }
}

</mosaic_0001>

<llo_original>
// kernel: tpu_custom_call.1
$region0: #{tpu_custom_call.1}
  #allocation0 [shape = 'u32[]', space=smem, size = 0x4, offset = 0x4, fixed_abs, tag = 'smem constant byte address 0x4 - core index']
  #allocation1 [shape = 'u32[144,128]{1,0:T(1,128)}', space=vmem, size = 0x12000, scoped, tag = 'internal scratch']
  %s0 = inlined_call_operand.vmem [shape: s32[8,1], index: 0, kind: input, shape index: {}]
  %s1 = inlined_call_operand.vmem [shape: f32[8,1], index: 1, kind: input, shape index: {}]
  %s2 = inlined_call_operand.vmem [shape: f32[104,32], index: 2, kind: input, shape index: {}]
  %s3 = inlined_call_operand.vmem [shape: f32[4,32,32], index: 3, kind: input, shape index: {}]
  %s4 = inlined_call_operand.vmem [shape: f32[4,1,32], index: 4, kind: input, shape index: {}]
  %s5 = inlined_call_operand.hbm [shape: f32[8,32], index: 5, kind: output, shape index: {}]
  %s6 = sld [smem:[#allocation0]]
  $region30: #{tpu_custom_call.1} parent=0
    _
  %s8 = ssub.s32 1, %s6
  %s9 = scalar_select 0, %s8, %s6
  $region1: #{tpu_custom_call.1} parent=0
    #allocation2 [shape = 'u8[4096]{0}', space=vmem, size = 0x1000, scoped, tag = 'output window, operand 0, single buffered']
    #allocation3 [shape = 's32[1]{0}', space=sflag, size = 0x4, scoped, tag = 'scoped memory for tpu_custom_call.1']
    %10 = vsyncpa [#allocation3], 0
    // Predicated region
    $region2: #{tpu_custom_call.1} parent=1 // pred_check
      _
    $region3: #{tpu_custom_call.1} parent=1 // pred_check_branch
      %12 = sbr.rel (0) target = $region5
    $region4: #{tpu_custom_call.1} parent=1 // pred_region
      _
    $region5: #{tpu_custom_call.1} parent=1 // pred_fallthru
      _
    // Predicated region
    $region6: #{tpu_custom_call.1} parent=1 // pred_check
      _
    $region7: #{tpu_custom_call.1} parent=1 // pred_check_branch
      %14 = sbr.rel (0) target = $region9
    $region8: #{tpu_custom_call.1} parent=1 // pred_region
      _
    $region9: #{tpu_custom_call.1} parent=1 // pred_fallthru
      _
    // Predicated region
    $region10: #{tpu_custom_call.1} parent=1 // pred_check
      _
    $region11: #{tpu_custom_call.1} parent=1 // pred_check_branch
      %16 = sbr.rel (0) target = $region13
    $region12: #{tpu_custom_call.1} parent=1 // pred_region
      _
    $region13: #{tpu_custom_call.1} parent=1 // pred_fallthru
      _
    // Predicated region
    $region14: #{tpu_custom_call.1} parent=1 // pred_check
      _
    $region15: #{tpu_custom_call.1} parent=1 // pred_check_branch
      %18 = sbr.rel (0) target = $region17
    $region16: #{tpu_custom_call.1} parent=1 // pred_region
      _
    $region17: #{tpu_custom_call.1} parent=1 // pred_fallthru
      _
    // Predicated region
    $region18: #{tpu_custom_call.1} parent=1 // pred_check
      _
    $region19: #{tpu_custom_call.1} parent=1 // pred_check_branch
      %20 = sbr.rel (0) target = $region21
    $region20: #{tpu_custom_call.1} parent=1 // pred_region
      _
    $region21: #{tpu_custom_call.1} parent=1 // pred_fallthru
      _
    %v21 = vld [vmem:[%s0] sm:$0xff]
    %v22 = vlaneseq
    %v23 = vand.u32 %v22, 127
    %24 = vset.pattern.permute.xlu0 0
    %25 = vperm.xlu0 %24, %v21
    %v26 = vpop.permute.xlu0 %25
    %vm27 = vcmp.eq.s32.totalorder %v26, %v23
    %v28 = vsel %vm27, 1, 0
    %v29 = vcvt.s32.f32 %v28
    %v30 = vld [vmem:[%s2] sm:$0xff]
    %v31 = vld [vmem:[%s2 + $0x8] sm:$0xff]
    %v32 = vld [vmem:[%s2 + $0x10] sm:$0xff]
    %v33 = vld [vmem:[%s2 + $0x18] sm:$0xff]
    %v34 = vld [vmem:[%s2 + $0x20] sm:$0xff]
    %v35 = vld [vmem:[%s2 + $0x28] sm:$0xff]
    %v36 = vld [vmem:[%s2 + $0x30] sm:$0xff]
    %v37 = vld [vmem:[%s2 + $0x38] sm:$0xff]
    %v38 = vld [vmem:[%s2 + $0x40] sm:$0xff]
    %v39 = vld [vmem:[%s2 + $0x48] sm:$0xff]
    %v40 = vld [vmem:[%s2 + $0x50] sm:$0xff]
    %v41 = vld [vmem:[%s2 + $0x58] sm:$0xff]
    %v42 = vld [vmem:[%s2 + $0x60] sm:$0xff]
    %vm43 = vcmask 850944
    %v45 = vsel %vm43, %v29, 0
    %47 = vmatprep.subr.mxu0 0.0
    %48 = vmatpush1.msra.mxu0 %v30
    %49 = vmatprep.subr.mxu0 0.0
    %50 = vmatpush1.msra.mxu0 %v31
    %51 = vmatprep.subr.mxu0 0.0
    %52 = vmatpush1.msra.mxu0 %v32
    %53 = vmatprep.subr.mxu0 0.0
    %54 = vmatpush1.msra.mxu0 %v33
    %55 = vmatprep.subr.mxu0 0.0
    %56 = vmatpush1.msra.mxu0 %v34
    %57 = vmatprep.subr.mxu0 0.0
    %58 = vmatpush1.msra.mxu0 %v35
    %59 = vmatprep.subr.mxu0 0.0
    %60 = vmatpush1.msra.mxu0 %v36
    %61 = vmatprep.subr.mxu0 0.0
    %62 = vmatpush1.msra.mxu0 %v37
    %63 = vmatprep.subr.mxu0 0.0
    %64 = vmatpush1.msra.mxu0 %v38
    %65 = vmatprep.subr.mxu0 0.0
    %66 = vmatpush1.msra.mxu0 %v39
    %67 = vmatprep.subr.mxu0 0.0
    %68 = vmatpush1.msra.mxu0 %v40
    %69 = vmatprep.subr.mxu0 0.0
    %70 = vmatpush1.msra.mxu0 %v41
    %71 = vmatprep.subr.mxu0 0.0
    %72 = vmatpush1.msra.mxu0 %v42
    %73 = vmatprep.subr.mxu0 0.0
    %74 = vmatpush1.msra.mxu0 0.0
    %75 = vmatprep.subr.mxu0 0.0
    %76 = vmatpush1.msra.mxu0 0.0
    %77 = vmatprep.subr.mxu0 0.0
    %78 = vmatpush1.msra.mxu0 0.0
    %79 = vmatprep.subr.mxu0 0.0
    %80 = vmatpush1.msra.mxu0 0.0
    %81 = vmatprep.subr.mxu0 0.0
    %82 = vmatpush1.msra.mxu0 0.0
    %83 = vmatprep.subr.mxu0 0.0
    %84 = vmatpush1.msra.mxu0 0.0
    %85 = vmatprep.subr.mxu0 0.0
    %86 = vmatpush1.msra.mxu0 0.0
    %87 = vmatprep.subr.mxu0 0.0
    %88 = vmatpush1.msra.mxu0 0.0
    %89 = vmatprep.subr.mxu0 0.0
    %90 = vmatpush1.msra.mxu0 0.0
    %91 = vmatprep.subr.mxu0 0.0
    %92 = vmatpush1.msra.mxu0 0.0
    %93 = vmatprep.subr.mxu0 0.0
    %94 = vmatpush1.msra.mxu0 0.0
    %95 = vmatprep.subr.mxu0 0.0
    %96 = vmatpush1.msra.mxu0 0.0
    %97 = vmatprep.subr.mxu0 0.0
    %98 = vmatpush1.msra.mxu0 0.0
    %99 = vmatprep.subr.mxu0 0.0
    %100 = vmatpush1.msra.mxu0 0.0
    %101 = vmatprep.subr.mxu0 0.0
    %102 = vmatpush1.msra.mxu0 0.0
    %103 = vmatprep.subr.mxu0 0.0
    %104 = vmatpush1.msra.mxu0 0.0
    %105 = vmatprep.subr.mxu0 0.0
    %106 = vmatpush1.msra.mxu0 0.0
    %107 = vmatprep.subr.mxu0 0.0
    %108 = vmatpush1.msra.mxu0 0.0
    %109 = vmatprep.subr.mxu0 0.0
    %110 = vmatpush1.msra.mxu0 0.0
    %111 = vmatprep.mubr.f32.mxu0 0.0
    %112 = vmatmul.mubr.f32.gmra.mrb[0].mxu0 %v45
    %v113 = vpop.f32.mrb[0].mxu0
    %v114 = vadd.f32 0.0, %v113
    %v115 = vpop.f32.mrb[0].mxu0
    %116 = vdwg.mxu0
    %v117 = vld [vmem:[%s1] sm:$0xff]
    %119 = vset.pattern.permute.xlu0 0
    %120 = vperm.xlu0 %119, %v117
    %v121 = vpop.permute.xlu0 %120
    %v123 = vmul.f32 %v114, %v121
    %v124 = vld [vmem:[%s3] sm:$0xff]
    %v125 = vld [vmem:[%s3 + $0x8] sm:$0xff]
    %v126 = vld [vmem:[%s3 + $0x10] sm:$0xff]
    %v127 = vld [vmem:[%s3 + $0x18] sm:$0xff]
    %v128 = vld [vmem:[%s4] sm:$0x1]
    %v130 = vlaneseq
    %v131 = vshrl.u32 %v130, 7
    %v132 = vsub.s32 0, %v131
    %v133 = vrot.slane %v128, %v132
    %vm135 = vcmask 261120
    %v137 = vsel %vm135, %v123, 0
    %139 = vmatprep.subr.mxu0 0.0
    %140 = vmatpush1.msra.mxu0 %v124
    %141 = vmatprep.subr.mxu0 0.0
    %142 = vmatpush1.msra.mxu0 %v125
    %143 = vmatprep.subr.mxu0 0.0
    %144 = vmatpush1.msra.mxu0 %v126
    %145 = vmatprep.subr.mxu0 0.0
    %146 = vmatpush1.msra.mxu0 %v127
    %147 = vmatprep.subr.mxu0 0.0
    %148 = vmatpush1.msra.mxu0 0.0
    %149 = vmatprep.subr.mxu0 0.0
    %150 = vmatpush1.msra.mxu0 0.0
    %151 = vmatprep.subr.mxu0 0.0
    %152 = vmatpush1.msra.mxu0 0.0
    %153 = vmatprep.subr.mxu0 0.0
    %154 = vmatpush1.msra.mxu0 0.0
    %155 = vmatprep.subr.mxu0 0.0
    %156 = vmatpush1.msra.mxu0 0.0
    %157 = vmatprep.subr.mxu0 0.0
    %158 = vmatpush1.msra.mxu0 0.0
    %159 = vmatprep.subr.mxu0 0.0
    %160 = vmatpush1.msra.mxu0 0.0
    %161 = vmatprep.subr.mxu0 0.0
    %162 = vmatpush1.msra.mxu0 0.0
    %163 = vmatprep.subr.mxu0 0.0
    %164 = vmatpush1.msra.mxu0 0.0
    %165 = vmatprep.subr.mxu0 0.0
    %166 = vmatpush1.msra.mxu0 0.0
    %167 = vmatprep.subr.mxu0 0.0
    %168 = vmatpush1.msra.mxu0 0.0
    %169 = vmatprep.subr.mxu0 0.0
    %170 = vmatpush1.msra.mxu0 0.0
    %171 = vmatprep.subr.mxu0 0.0
    %172 = vmatpush1.msra.mxu0 0.0
    %173 = vmatprep.subr.mxu0 0.0
    %174 = vmatpush1.msra.mxu0 0.0
    %175 = vmatprep.subr.mxu0 0.0
    %176 = vmatpush1.msra.mxu0 0.0
    %177 = vmatprep.subr.mxu0 0.0
    %178 = vmatpush1.msra.mxu0 0.0
    %179 = vmatprep.subr.mxu0 0.0
    %180 = vmatpush1.msra.mxu0 0.0
    %181 = vmatprep.subr.mxu0 0.0
    %182 = vmatpush1.msra.mxu0 0.0
    %183 = vmatprep.subr.mxu0 0.0
    %184 = vmatpush1.msra.mxu0 0.0
    %185 = vmatprep.subr.mxu0 0.0
    %186 = vmatpush1.msra.mxu0 0.0
    %187 = vmatprep.subr.mxu0 0.0
    %188 = vmatpush1.msra.mxu0 0.0
    %189 = vmatprep.subr.mxu0 0.0
    %190 = vmatpush1.msra.mxu0 0.0
    %191 = vmatprep.subr.mxu0 0.0
    %192 = vmatpush1.msra.mxu0 0.0
    %193 = vmatprep.subr.mxu0 0.0
    %194 = vmatpush1.msra.mxu0 0.0
    %195 = vmatprep.subr.mxu0 0.0
    %196 = vmatpush1.msra.mxu0 0.0
    %197 = vmatprep.subr.mxu0 0.0
    %198 = vmatpush1.msra.mxu0 0.0
    %199 = vmatprep.subr.mxu0 0.0
    %200 = vmatpush1.msra.mxu0 0.0
    %201 = vmatprep.subr.mxu0 0.0
    %202 = vmatpush1.msra.mxu0 0.0
    %203 = vmatprep.mubr.f32.mxu0 0.0
    %204 = vmatmul.mubr.f32.gmra.mrb[0].mxu0 %v137
    %v205 = vpop.f32.mrb[0].mxu0
    %v206 = vadd.f32 %v133, %v205
    %v207 = vpop.f32.mrb[0].mxu0
    %208 = vdwg.mxu0
    %v209 = vmul.f32 %v206, %v206
    %v210 = vmul.f32 %v206, %v209
    %v211 = vmul.f32 %v210, 0.044715
    %v212 = vadd.f32 %v206, %v211
    %v213 = vmul.f32 %v212, 0.7978846
    %v214 = vtanh.pop %v213
    %v215 = vadd.f32 %v214, 1.0
    %v216 = vmul.f32 %v215, 0.5
    %v217 = vmul.f32 %v206, %v216
    %s218 = scalar_lea.vmem %s3, 32
    %v219 = vld [vmem:[%s218] sm:$0xff]
    %v220 = vld [vmem:[%s218 + $0x8] sm:$0xff]
    %v221 = vld [vmem:[%s218 + $0x10] sm:$0xff]
    %v222 = vld [vmem:[%s218 + $0x18] sm:$0xff]
    %s223 = scalar_lea.vmem %s4, 1
    %v224 = vld [vmem:[%s223] sm:$0x1]
    %v226 = vlaneseq
    %v227 = vshrl.u32 %v226, 7
    %v228 = vsub.s32 0, %v227
    %v229 = vrot.slane %v224, %v228
    %v232 = vsel %vm135, %v217, 0
    %234 = vmatprep.subr.mxu0 0.0
    %235 = vmatpush1.msra.mxu0 %v219
    %236 = vmatprep.subr.mxu0 0.0
    %237 = vmatpush1.msra.mxu0 %v220
    %238 = vmatprep.subr.mxu0 0.0
    %239 = vmatpush1.msra.mxu0 %v221
    %240 = vmatprep.subr.mxu0 0.0
    %241 = vmatpush1.msra.mxu0 %v222
    %242 = vmatprep.subr.mxu0 0.0
    %243 = vmatpush1.msra.mxu0 0.0
    %244 = vmatprep.subr.mxu0 0.0
    %245 = vmatpush1.msra.mxu0 0.0
    %246 = vmatprep.subr.mxu0 0.0
    %247 = vmatpush1.msra.mxu0 0.0
    %248 = vmatprep.subr.mxu0 0.0
    %249 = vmatpush1.msra.mxu0 0.0
    %250 = vmatprep.subr.mxu0 0.0
    %251 = vmatpush1.msra.mxu0 0.0
    %252 = vmatprep.subr.mxu0 0.0
    %253 = vmatpush1.msra.mxu0 0.0
    %254 = vmatprep.subr.mxu0 0.0
    %255 = vmatpush1.msra.mxu0 0.0
    %256 = vmatprep.subr.mxu0 0.0
    %257 = vmatpush1.msra.mxu0 0.0
    %258 = vmatprep.subr.mxu0 0.0
    %259 = vmatpush1.msra.mxu0 0.0
    %260 = vmatprep.subr.mxu0 0.0
    %261 = vmatpush1.msra.mxu0 0.0
    %262 = vmatprep.subr.mxu0 0.0
    %263 = vmatpush1.msra.mxu0 0.0
    %264 = vmatprep.subr.mxu0 0.0
    %265 = vmatpush1.msra.mxu0 0.0
    %266 = vmatprep.subr.mxu0 0.0
    %267 = vmatpush1.msra.mxu0 0.0
    %268 = vmatprep.subr.mxu0 0.0
    %269 = vmatpush1.msra.mxu0 0.0
    %270 = vmatprep.subr.mxu0 0.0
    %271 = vmatpush1.msra.mxu0 0.0
    %272 = vmatprep.subr.mxu0 0.0
    %273 = vmatpush1.msra.mxu0 0.0
    %274 = vmatprep.subr.mxu0 0.0
    %275 = vmatpush1.msra.mxu0 0.0
    %276 = vmatprep.subr.mxu0 0.0
    %277 = vmatpush1.msra.mxu0 0.0
    %278 = vmatprep.subr.mxu0 0.0
    %279 = vmatpush1.msra.mxu0 0.0
    %280 = vmatprep.subr.mxu0 0.0
    %281 = vmatpush1.msra.mxu0 0.0
    %282 = vmatprep.subr.mxu0 0.0
    %283 = vmatpush1.msra.mxu0 0.0
    %284 = vmatprep.subr.mxu0 0.0
    %285 = vmatpush1.msra.mxu0 0.0
    %286 = vmatprep.subr.mxu0 0.0
    %287 = vmatpush1.msra.mxu0 0.0
    %288 = vmatprep.subr.mxu0 0.0
    %289 = vmatpush1.msra.mxu0 0.0
    %290 = vmatprep.subr.mxu0 0.0
    %291 = vmatpush1.msra.mxu0 0.0
    %292 = vmatprep.subr.mxu0 0.0
    %293 = vmatpush1.msra.mxu0 0.0
    %294 = vmatprep.subr.mxu0 0.0
    %295 = vmatpush1.msra.mxu0 0.0
    %296 = vmatprep.subr.mxu0 0.0
    %297 = vmatpush1.msra.mxu0 0.0
    %298 = vmatprep.mubr.f32.mxu0 0.0
    %299 = vmatmul.mubr.f32.gmra.mrb[0].mxu0 %v232
    %v300 = vpop.f32.mrb[0].mxu0
    %v301 = vadd.f32 %v229, %v300
    %v302 = vpop.f32.mrb[0].mxu0
    %303 = vdwg.mxu0
    %v304 = vmul.f32 %v301, %v301
    %v305 = vmul.f32 %v301, %v304
    %v306 = vmul.f32 %v305, 0.044715
    %v307 = vadd.f32 %v301, %v306
    %v308 = vmul.f32 %v307, 0.7978846
    %v309 = vtanh.pop %v308
    %v310 = vadd.f32 %v309, 1.0
    %v311 = vmul.f32 %v310, 0.5
    %v312 = vmul.f32 %v301, %v311
    %v313 = vadd.f32 %v217, %v312
    %s314 = scalar_lea.vmem %s3, 64
    %v315 = vld [vmem:[%s314] sm:$0xff]
    %v316 = vld [vmem:[%s314 + $0x8] sm:$0xff]
    %v317 = vld [vmem:[%s314 + $0x10] sm:$0xff]
    %v318 = vld [vmem:[%s314 + $0x18] sm:$0xff]
    %s319 = scalar_lea.vmem %s4, 2
    %v320 = vld [vmem:[%s319] sm:$0x1]
    %v322 = vlaneseq
    %v323 = vshrl.u32 %v322, 7
    %v324 = vsub.s32 0, %v323
    %v325 = vrot.slane %v320, %v324
    %v328 = vsel %vm135, %v312, 0
    %330 = vmatprep.subr.mxu0 0.0
    %331 = vmatpush1.msra.mxu0 %v315
    %332 = vmatprep.subr.mxu0 0.0
    %333 = vmatpush1.msra.mxu0 %v316
    %334 = vmatprep.subr.mxu0 0.0
    %335 = vmatpush1.msra.mxu0 %v317
    %336 = vmatprep.subr.mxu0 0.0
    %337 = vmatpush1.msra.mxu0 %v318
    %338 = vmatprep.subr.mxu0 0.0
    %339 = vmatpush1.msra.mxu0 0.0
    %340 = vmatprep.subr.mxu0 0.0
    %341 = vmatpush1.msra.mxu0 0.0
    %342 = vmatprep.subr.mxu0 0.0
    %343 = vmatpush1.msra.mxu0 0.0
    %344 = vmatprep.subr.mxu0 0.0
    %345 = vmatpush1.msra.mxu0 0.0
    %346 = vmatprep.subr.mxu0 0.0
    %347 = vmatpush1.msra.mxu0 0.0
    %348 = vmatprep.subr.mxu0 0.0
    %349 = vmatpush1.msra.mxu0 0.0
    %350 = vmatprep.subr.mxu0 0.0
    %351 = vmatpush1.msra.mxu0 0.0
    %352 = vmatprep.subr.mxu0 0.0
    %353 = vmatpush1.msra.mxu0 0.0
    %354 = vmatprep.subr.mxu0 0.0
    %355 = vmatpush1.msra.mxu0 0.0
    %356 = vmatprep.subr.mxu0 0.0
    %357 = vmatpush1.msra.mxu0 0.0
    %358 = vmatprep.subr.mxu0 0.0
    %359 = vmatpush1.msra.mxu0 0.0
    %360 = vmatprep.subr.mxu0 0.0
    %361 = vmatpush1.msra.mxu0 0.0
    %362 = vmatprep.subr.mxu0 0.0
    %363 = vmatpush1.msra.mxu0 0.0
    %364 = vmatprep.subr.mxu0 0.0
    %365 = vmatpush1.msra.mxu0 0.0
    %366 = vmatprep.subr.mxu0 0.0
    %367 = vmatpush1.msra.mxu0 0.0
    %368 = vmatprep.subr.mxu0 0.0
    %369 = vmatpush1.msra.mxu0 0.0
    %370 = vmatprep.subr.mxu0 0.0
    %371 = vmatpush1.msra.mxu0 0.0
    %372 = vmatprep.subr.mxu0 0.0
    %373 = vmatpush1.msra.mxu0 0.0
    %374 = vmatprep.subr.mxu0 0.0
    %375 = vmatpush1.msra.mxu0 0.0
    %376 = vmatprep.subr.mxu0 0.0
    %377 = vmatpush1.msra.mxu0 0.0
    %378 = vmatprep.subr.mxu0 0.0
    %379 = vmatpush1.msra.mxu0 0.0
    %380 = vmatprep.subr.mxu0 0.0
    %381 = vmatpush1.msra.mxu0 0.0
    %382 = vmatprep.subr.mxu0 0.0
    %383 = vmatpush1.msra.mxu0 0.0
    %384 = vmatprep.subr.mxu0 0.0
    %385 = vmatpush1.msra.mxu0 0.0
    %386 = vmatprep.subr.mxu0 0.0
    %387 = vmatpush1.msra.mxu0 0.0
    %388 = vmatprep.subr.mxu0 0.0
    %389 = vmatpush1.msra.mxu0 0.0
    %390 = vmatprep.subr.mxu0 0.0
    %391 = vmatpush1.msra.mxu0 0.0
    %392 = vmatprep.subr.mxu0 0.0
    %393 = vmatpush1.msra.mxu0 0.0
    %394 = vmatprep.mubr.f32.mxu0 0.0
    %395 = vmatmul.mubr.f32.gmra.mrb[0].mxu0 %v328
    %v396 = vpop.f32.mrb[0].mxu0
    %v397 = vadd.f32 %v325, %v396
    %v398 = vpop.f32.mrb[0].mxu0
    %399 = vdwg.mxu0
    %v400 = vmul.f32 %v397, %v397
    %v401 = vmul.f32 %v397, %v400
    %v402 = vmul.f32 %v401, 0.044715
    %v403 = vadd.f32 %v397, %v402
    %v404 = vmul.f32 %v403, 0.7978846
    %v405 = vtanh.pop %v404
    %v406 = vadd.f32 %v405, 1.0
    %v407 = vmul.f32 %v406, 0.5
    %v408 = vmul.f32 %v397, %v407
    %v409 = vadd.f32 %v313, %v408
    %s410 = scalar_lea.vmem %s3, 96
    %v411 = vld [vmem:[%s410] sm:$0xff]
    %v412 = vld [vmem:[%s410 + $0x8] sm:$0xff]
    %v413 = vld [vmem:[%s410 + $0x10] sm:$0xff]
    %v414 = vld [vmem:[%s410 + $0x18] sm:$0xff]
    %s415 = scalar_lea.vmem %s4, 3
    %v416 = vld [vmem:[%s415] sm:$0x1]
    %v418 = vlaneseq
    %v419 = vshrl.u32 %v418, 7
    %v420 = vsub.s32 0, %v419
    %v421 = vrot.slane %v416, %v420
    %v424 = vsel %vm135, %v408, 0
    %426 = vmatprep.subr.mxu0 0.0
    %427 = vmatpush1.msra.mxu0 %v411
    %428 = vmatprep.subr.mxu0 0.0
    %429 = vmatpush1.msra.mxu0 %v412
    %430 = vmatprep.subr.mxu0 0.0
    %431 = vmatpush1.msra.mxu0 %v413
    %432 = vmatprep.subr.mxu0 0.0
    %433 = vmatpush1.msra.mxu0 %v414
    %434 = vmatprep.subr.mxu0 0.0
    %435 = vmatpush1.msra.mxu0 0.0
    %436 = vmatprep.subr.mxu0 0.0
    %437 = vmatpush1.msra.mxu0 0.0
    %438 = vmatprep.subr.mxu0 0.0
    %439 = vmatpush1.msra.mxu0 0.0
    %440 = vmatprep.subr.mxu0 0.0
    %441 = vmatpush1.msra.mxu0 0.0
    %442 = vmatprep.subr.mxu0 0.0
    %443 = vmatpush1.msra.mxu0 0.0
    %444 = vmatprep.subr.mxu0 0.0
    %445 = vmatpush1.msra.mxu0 0.0
    %446 = vmatprep.subr.mxu0 0.0
    %447 = vmatpush1.msra.mxu0 0.0
    %448 = vmatprep.subr.mxu0 0.0
    %449 = vmatpush1.msra.mxu0 0.0
    %450 = vmatprep.subr.mxu0 0.0
    %451 = vmatpush1.msra.mxu0 0.0
    %452 = vmatprep.subr.mxu0 0.0
    %453 = vmatpush1.msra.mxu0 0.0
    %454 = vmatprep.subr.mxu0 0.0
    %455 = vmatpush1.msra.mxu0 0.0
    %456 = vmatprep.subr.mxu0 0.0
    %457 = vmatpush1.msra.mxu0 0.0
    %458 = vmatprep.subr.mxu0 0.0
    %459 = vmatpush1.msra.mxu0 0.0
    %460 = vmatprep.subr.mxu0 0.0
    %461 = vmatpush1.msra.mxu0 0.0
    %462 = vmatprep.subr.mxu0 0.0
    %463 = vmatpush1.msra.mxu0 0.0
    %464 = vmatprep.subr.mxu0 0.0
    %465 = vmatpush1.msra.mxu0 0.0
    %466 = vmatprep.subr.mxu0 0.0
    %467 = vmatpush1.msra.mxu0 0.0
    %468 = vmatprep.subr.mxu0 0.0
    %469 = vmatpush1.msra.mxu0 0.0
    %470 = vmatprep.subr.mxu0 0.0
    %471 = vmatpush1.msra.mxu0 0.0
    %472 = vmatprep.subr.mxu0 0.0
    %473 = vmatpush1.msra.mxu0 0.0
    %474 = vmatprep.subr.mxu0 0.0
    %475 = vmatpush1.msra.mxu0 0.0
    %476 = vmatprep.subr.mxu0 0.0
    %477 = vmatpush1.msra.mxu0 0.0
    %478 = vmatprep.subr.mxu0 0.0
    %479 = vmatpush1.msra.mxu0 0.0
    %480 = vmatprep.subr.mxu0 0.0
    %481 = vmatpush1.msra.mxu0 0.0
    %482 = vmatprep.subr.mxu0 0.0
    %483 = vmatpush1.msra.mxu0 0.0
    %484 = vmatprep.subr.mxu0 0.0
    %485 = vmatpush1.msra.mxu0 0.0
    %486 = vmatprep.subr.mxu0 0.0
    %487 = vmatpush1.msra.mxu0 0.0
    %488 = vmatprep.subr.mxu0 0.0
    %489 = vmatpush1.msra.mxu0 0.0
    %490 = vmatprep.mubr.f32.mxu0 0.0
    %491 = vmatmul.mubr.f32.gmra.mrb[0].mxu0 %v424
    %v492 = vpop.f32.mrb[0].mxu0
    %v493 = vadd.f32 %v421, %v492
    %v494 = vpop.f32.mrb[0].mxu0
    %495 = vdwg.mxu0
    %v496 = vmul.f32 %v493, %v493
    %v497 = vmul.f32 %v493, %v496
    %v498 = vmul.f32 %v497, 0.044715
    %v499 = vadd.f32 %v493, %v498
    %v500 = vmul.f32 %v499, 0.7978846
    %v501 = vtanh.pop %v500
    %v502 = vadd.f32 %v501, 1.0
    %v503 = vmul.f32 %v502, 0.5
    %v504 = vmul.f32 %v493, %v503
    %v505 = vadd.f32 %v409, %v504
    %506 = vst.msk [vmem:[#allocation2] sm:$0xff] %vm135, %v505
    // Predicated region
    $region22: #{tpu_custom_call.1} parent=1 // pred_check
      _
    $region23: #{tpu_custom_call.1} parent=1 // pred_check_branch
      %508 = sbr.rel (0) target = $region25
    $region24: #{tpu_custom_call.1} parent=1 // pred_region
      %s510 = ssub.s32 128, 128
      %511 = vsyncadd [#allocation3], %s510
      %s513 = sshll.u32 [#allocation2], 4
      %s514 = int_to_ptr.vmem [resolvable:$true] %s513
      %516 = dma.vmem_to_hbm [thread:$0]  %s514, 128, %s5, [#allocation3]
    $region25: #{tpu_custom_call.1} parent=1 // pred_fallthru
      _
    // Predicated region
    $region26: #{tpu_custom_call.1} parent=1 // pred_check
      _
    $region27: #{tpu_custom_call.1} parent=1 // pred_check_branch
      %518 = sbr.rel (0) target = $region29
    $region28: #{tpu_custom_call.1} parent=1 // pred_region
      %519 = dma.done [#allocation3], 128
    $region29: #{tpu_custom_call.1} parent=1 // pred_fallthru
      _
    %520 = vsyncpa [#allocation3], 1

</llo_original>
